<compile_context>
chip_gen: v7x
topology: tpu7x:2x2x1
jax: 0.10.0
libtpu: 0.0.40
codegen_flags: <defaults>
</compile_context>

<pallas_src>
import functools

import jax
import jax.numpy as jnp
from jax.experimental import pallas as pl
from jax.experimental.pallas import tpu as pltpu


def _pinn_loss_kernel(pred_ref, x_ref, tgt_ref, bt_ref, at_ref, b_ref,   # in
                      mse_out, pinn_out,                                 # out
                      mse_acc, pinn_acc,                                 # scratch
                      *, n_valid, tile, tiles_per_core):
    c = pl.program_id(0)      # core-split ("parallel") axis
    j = pl.program_id(1)      # N-reduction ("arbitrary") axis

    @pl.when(j == 0)
    def _init():
        mse_acc[...] = jnp.zeros_like(mse_acc)
        pinn_acc[...] = jnp.zeros_like(pinn_acc)

    # Row-validity mask for the (possibly ragged / fully out-of-range) tile.
    row0 = (c * tiles_per_core + j) * tile
    rows = row0 + jax.lax.broadcasted_iota(jnp.int32, (tile, 1), 0)
    valid = rows < n_valid                                   # (tile, 1) bool

    pred = pred_ref[...]                                     # (tile, dp)

    # Constraint residual for this tile.  Rows are independent, so garbage in
    # out-of-range rows only affects rows that are masked to exactly 0 below
    # (which also zeroes their -b contribution).
    r = (jnp.dot(pred, bt_ref[...], preferred_element_type=jnp.float32)
         + jnp.dot(x_ref[...], at_ref[...], preferred_element_type=jnp.float32)
         - b_ref[...])                                       # (tile, m) f32
    r = jnp.where(valid, r, 0.0)
    pinn_acc[...] += r * r                                   # pure VPU add

    # MSE partial.
    d = pred.astype(jnp.float32) - tgt_ref[...].astype(jnp.float32)
    d = jnp.where(valid, d, 0.0)
    mse_acc[...] += d * d                                    # pure VPU add

    @pl.when(j == pl.num_programs(1) - 1)
    def _finalize():
        # One cross-sublane reduce per core (not per tile).
        mse_out[...] = jnp.sum(mse_acc[...], axis=0, keepdims=True)[None]
        pinn_out[...] = jnp.sum(pinn_acc[...], axis=0, keepdims=True)[None]


def pinn_loss(X, pred, target, A, B, b, mu, *, tile_n=1024, num_cores=1):
    """Returns (mse_loss, pinn_loss) as float32 scalars (== PINNLoss.forward)."""
    X = jnp.asarray(X)
    pred = jnp.asarray(pred)
    target = jnp.asarray(target)
    A = jnp.asarray(A)
    B = jnp.asarray(B)
    b = jnp.asarray(b)

    N, dx = X.shape
    _, dp = pred.shape
    m = A.shape[0]
    assert A.shape == (m, dx) and B.shape == (m, dp) and b.shape == (m,)
    assert pred.shape == target.shape == (N, dp)
    assert num_cores >= 1

    def _ru(v, k):
        return ((v + k - 1) // k) * k

    # Sublane-align N (copies only when N % 8 != 0, and only +<=7 rows).
    n_pad = _ru(N, 8)
    if n_pad != N:
        padn = ((0, n_pad - N), (0, 0))
        pred, X, target = (jnp.pad(v, padn) for v in (pred, X, target))

    tile = min(_ru(tile_n, 8), n_pad)
    n_blocks = pl.cdiv(n_pad, tile)
    tiles_per_core = pl.cdiv(n_blocks, num_cores)

    # Tiny resident operands.  Bias kept in f32 (precision; it is subtracted
    # from the f32 matmul accumulator, not folded into the contraction).
    bt = B.T                                         # (dp, m)
    at = A.T                                         # (dx, m)
    b_row = b.astype(jnp.float32).reshape(1, m)      # (1, m)

    def row_block(c, j):
        # Clamp fully-out-of-range blocks (possible when num_cores does not
        # divide n_blocks); their rows are masked to zero inside the kernel.
        return (jnp.minimum(c * tiles_per_core + j, n_blocks - 1), 0)

    const_map = lambda c, j: (0, 0)
    out_map = lambda c, j: (c, 0, 0)

    kernel = functools.partial(_pinn_loss_kernel, n_valid=N, tile=tile,
                               tiles_per_core=tiles_per_core)

    # Advisory cost estimate; HBM bytes include the (8,128)-tiled lane padding.
    def _hbm_bytes(r, cdim, dtype):
        return _ru(r, 8) * _ru(cdim, 128) * jnp.dtype(dtype).itemsize

    bytes_accessed = int(_hbm_bytes(n_pad, dp, pred.dtype)
                         + _hbm_bytes(n_pad, dx, X.dtype)
                         + _hbm_bytes(n_pad, dp, target.dtype)
                         + _hbm_bytes(dp, m, bt.dtype)
                         + _hbm_bytes(dx, m, at.dtype)
                         + _hbm_bytes(1, m, jnp.float32)
                         + 2 * num_cores * _hbm_bytes(1, max(dp, m),
                                                      jnp.float32))
    flops = int(2 * n_pad * m * (dp + dx) + 4 * n_pad * m + 4 * n_pad * dp)

    mse_parts, pinn_parts = pl.pallas_call(
        kernel,
        out_shape=[jax.ShapeDtypeStruct((num_cores, 1, dp), jnp.float32),
                   jax.ShapeDtypeStruct((num_cores, 1, m), jnp.float32)],
        grid_spec=pltpu.PrefetchScalarGridSpec(
            num_scalar_prefetch=0,
            grid=(num_cores, tiles_per_core),
            in_specs=[
                pl.BlockSpec((tile, dp), row_block),     # pred   (streamed)
                pl.BlockSpec((tile, dx), row_block),     # X      (streamed)
                pl.BlockSpec((tile, dp), row_block),     # target (streamed)
                pl.BlockSpec((dp, m), const_map),        # B^T    (resident)
                pl.BlockSpec((dx, m), const_map),        # A^T    (resident)
                pl.BlockSpec((1, m), const_map),         # b      (resident)
            ],
            out_specs=[pl.BlockSpec((1, 1, dp), out_map),
                       pl.BlockSpec((1, 1, m), out_map)],
            scratch_shapes=[pltpu.VMEM((tile, dp), jnp.float32),
                            pltpu.VMEM((tile, m), jnp.float32)],
        ),
        compiler_params=pltpu.CompilerParams(
            # Core-split axis is parallel; the N-reduction axis stays
            # sequential so the accumulator init/finalize pattern is valid.
            dimension_semantics=("parallel", "arbitrary")),
        cost_estimate=pl.CostEstimate(flops=flops, transcendentals=0,
                                      bytes_accessed=bytes_accessed),
    )(pred, X, target, bt, at, b_row)

    # Tiny epilogue: cross-core partial sums -> means; mu applied here.
    mse = jnp.sum(mse_parts) / (N * dp)
    pinn = jnp.asarray(mu, jnp.float32) * (jnp.sum(pinn_parts) / (N * m))
    return mse, pinn


def _reference(X, pred, target, A, B, b, mu):
    X, pred, target, A, B, b = (jnp.asarray(v, jnp.float32)
                                for v in (X, pred, target, A, B, b))
    mse = jnp.mean((pred - target) ** 2)
    resid = B @ pred.T + A @ X.T - b[:, None]
    pinn = jnp.mean(mu * resid ** 2)
    return mse, pinn


def _check(X, pred, target, A, B, b, mu, **kw):
    mse, pinn = pinn_loss(X, pred, target, A, B, b, mu, **kw)
    jax.block_until_ready((mse, pinn))
    mse_ref, pinn_ref = _reference(X, pred, target, A, B, b, mu)
    assert jnp.allclose(mse, mse_ref, atol=1e-4, rtol=1e-4), (mse, mse_ref)
    assert jnp.allclose(pinn, pinn_ref, atol=1e-4, rtol=1e-4), (pinn, pinn_ref)


if __name__ == "__main__":
    key = jax.random.PRNGKey(0)
    k1, k2, k3, k4, k5, k6 = jax.random.split(key, 6)

    # Small, forward-consistent shapes (single tile, single core).
    N, dx, dp, m = 8, 16, 16, 8
    mu = 0.5
    X = jax.random.normal(k1, (N, dx), dtype=jnp.float32)
    pred = jax.random.normal(k2, (N, dp), dtype=jnp.float32)
    target = jax.random.normal(k3, (N, dp), dtype=jnp.float32)
    A = jax.random.normal(k4, (m, dx), dtype=jnp.float32)
    B = jax.random.normal(k5, (m, dp), dtype=jnp.float32)
    b = jax.random.normal(k6, (m,), dtype=jnp.float32)
    _check(X, pred, target, A, B, b, mu)

    # Multi-tile + ragged last tile + 2-way core split (also exercises the
    # clamp of fully-out-of-range blocks and per-core partial outputs).
    N2 = 200
    X2 = jax.random.normal(k1, (N2, dx), dtype=jnp.float32)
    pred2 = jax.random.normal(k2, (N2, dp), dtype=jnp.float32)
    target2 = jax.random.normal(k3, (N2, dp), dtype=jnp.float32)
    _check(X2, pred2, target2, A, B, b, mu, tile_n=48, num_cores=2)

    print("KERNEL_OK")
</pallas_src>

<mosaic_0001>
module attributes {stable_mosaic.version = 11 : i64} {
  func.func @_pinn_loss_kernel(%arg0: i32, %arg1: i32, %arg2: memref<8x16xf32, #tpu.memory_space<vmem>>, %arg3: memref<8x16xf32, #tpu.memory_space<vmem>>, %arg4: memref<8x16xf32, #tpu.memory_space<vmem>>, %arg5: memref<16x8xf32, #tpu.memory_space<vmem>>, %arg6: memref<16x8xf32, #tpu.memory_space<vmem>>, %arg7: memref<1x8xf32, #tpu.memory_space<vmem>>, %arg8: memref<1x1x16xf32, #tpu.memory_space<vmem>>, %arg9: memref<1x1x8xf32, #tpu.memory_space<vmem>>, %arg10: memref<8x16xf32, #tpu.memory_space<vmem>>, %arg11: memref<8x8xf32, #tpu.memory_space<vmem>>) attributes {dimension_semantics = [#tpu.dimension_semantics<parallel>, #tpu.dimension_semantics<arbitrary>], iteration_bounds = array<i64: 1, 1>, scalar_prefetch = 0 : i64, scratch_operands = 2 : i64, tpu.core_type = #tpu.core_type<tc>, window_params = [{transform_indices = @transform_0, window_bounds = array<i64: 8, 16>}, {transform_indices = @transform_1, window_bounds = array<i64: 8, 16>}, {transform_indices = @transform_2, window_bounds = array<i64: 8, 16>}, {pipeline_mode = #tpu.pipeline_mode<synchronous>, transform_indices = @transform_3, window_bounds = array<i64: 16, 8>}, {pipeline_mode = #tpu.pipeline_mode<synchronous>, transform_indices = @transform_4, window_bounds = array<i64: 16, 8>}, {pipeline_mode = #tpu.pipeline_mode<synchronous>, transform_indices = @transform_5, window_bounds = array<i64: 1, 8>}, {transform_indices = @transform_6, window_bounds = array<i64: 1, 1, 16>}, {transform_indices = @transform_7, window_bounds = array<i64: 1, 1, 8>}]} {
    %c0_i32 = arith.constant 0 : i32
    %0 = arith.cmpi eq, %arg1, %c0_i32 : i32
    %1 = arith.extui %0 : i1 to i32
    %c0_i32_0 = arith.constant 0 : i32
    %2 = arith.cmpi ne, %1, %c0_i32_0 : i32
    scf.if %2 {
      %cst_26 = arith.constant 0.000000e+00 : f32
      %42 = vector.broadcast %cst_26 : f32 to vector<8x16xf32>
      %c0_27 = arith.constant 0 : index
      %c0_28 = arith.constant 0 : index
      %43 = vector.load %arg10[%c0_27, %c0_28] : memref<8x16xf32, #tpu.memory_space<vmem>>, vector<8x16xf32>
      tpu.vector_store %arg10[%c0_27, %c0_28], %42 {strides = array<i32>} : memref<8x16xf32, #tpu.memory_space<vmem>>, vector<8x16xf32>,
      %cst_29 = arith.constant 0.000000e+00 : f32
      %44 = vector.broadcast %cst_29 : f32 to vector<8x8xf32>
      %c0_30 = arith.constant 0 : index
      %c0_31 = arith.constant 0 : index
      %45 = vector.load %arg11[%c0_30, %c0_31] : memref<8x8xf32, #tpu.memory_space<vmem>>, vector<8x8xf32>
      tpu.vector_store %arg11[%c0_30, %c0_31], %44 {strides = array<i32>} : memref<8x8xf32, #tpu.memory_space<vmem>>, vector<8x8xf32>,
    } else {
    }
    %c1_i32 = arith.constant 1 : i32
    %3 = arith.muli %arg0, %c1_i32 : i32
    %4 = arith.addi %3, %arg1 : i32
    %c8_i32 = arith.constant 8 : i32
    %5 = arith.muli %4, %c8_i32 : i32
    %6 = tpu.iota {dimensions = array<i32: 0>} : vector<8x1xi32>
    %7 = vector.broadcast %5 : i32 to vector<8x1xi32>
    %8 = arith.addi %7, %6 : vector<8x1xi32>
    %c8_i32_1 = arith.constant 8 : i32
    %9 = vector.broadcast %c8_i32_1 : i32 to vector<8x1xi32>
    %10 = arith.cmpi slt, %8, %9 : vector<8x1xi32>
    %c0 = arith.constant 0 : index
    %c0_2 = arith.constant 0 : index
    %11 = vector.load %arg2[%c0, %c0_2] : memref<8x16xf32, #tpu.memory_space<vmem>>, vector<8x16xf32>
    %c0_3 = arith.constant 0 : index
    %c0_4 = arith.constant 0 : index
    %12 = vector.load %arg5[%c0_3, %c0_4] : memref<16x8xf32, #tpu.memory_space<vmem>>, vector<16x8xf32>
    %cst = arith.constant dense<0.000000e+00> : vector<8x8xf32>
    %13 = tpu.matmul %11, %12, %cst {dimension_numbers = #tpu.dot_dimension_numbers<[1], [0], [0], [1], [0, 0, 1, 1], [], []>} : vector<8x16xf32>, vector<16x8xf32>, vector<8x8xf32> -> vector<8x8xf32>
    %c0_5 = arith.constant 0 : index
    %c0_6 = arith.constant 0 : index
    %14 = vector.load %arg3[%c0_5, %c0_6] : memref<8x16xf32, #tpu.memory_space<vmem>>, vector<8x16xf32>
    %c0_7 = arith.constant 0 : index
    %c0_8 = arith.constant 0 : index
    %15 = vector.load %arg6[%c0_7, %c0_8] : memref<16x8xf32, #tpu.memory_space<vmem>>, vector<16x8xf32>
    %cst_9 = arith.constant dense<0.000000e+00> : vector<8x8xf32>
    %16 = tpu.matmul %14, %15, %cst_9 {dimension_numbers = #tpu.dot_dimension_numbers<[1], [0], [0], [1], [0, 0, 1, 1], [], []>} : vector<8x16xf32>, vector<16x8xf32>, vector<8x8xf32> -> vector<8x8xf32>
    %17 = arith.addf %13, %16 : vector<8x8xf32>
    %c0_10 = arith.constant 0 : index
    %c0_11 = arith.constant 0 : index
    %18 = vector.load %arg7[%c0_10, %c0_11] : memref<1x8xf32, #tpu.memory_space<vmem>>, vector<1x8xf32>
    %19 = vector.broadcast %18 : vector<1x8xf32> to vector<8x8xf32>
    %20 = arith.subf %17, %19 : vector<8x8xf32>
    %cst_12 = arith.constant 0.000000e+00 : f32
    %21 = vector.shape_cast %10 : vector<8x1xi1> to vector<8x1xi1>
    %22 = vector.broadcast %21 : vector<8x1xi1> to vector<8x8xi1>
    %23 = vector.broadcast %cst_12 : f32 to vector<8x8xf32>
    %24 = arith.select %22, %20, %23 : vector<8x8xi1>, vector<8x8xf32>
    %c0_13 = arith.constant 0 : index
    %c0_14 = arith.constant 0 : index
    %25 = vector.load %arg11[%c0_13, %c0_14] : memref<8x8xf32, #tpu.memory_space<vmem>>, vector<8x8xf32>
    %26 = arith.mulf %24, %24 : vector<8x8xf32>
    %27 = arith.addf %25, %26 : vector<8x8xf32>
    %c0_15 = arith.constant 0 : index
    %c0_16 = arith.constant 0 : index
    %28 = vector.load %arg11[%c0_15, %c0_16] : memref<8x8xf32, #tpu.memory_space<vmem>>, vector<8x8xf32>
    tpu.vector_store %arg11[%c0_15, %c0_16], %27 {strides = array<i32>} : memref<8x8xf32, #tpu.memory_space<vmem>>, vector<8x8xf32>,
    %c0_17 = arith.constant 0 : index
    %c0_18 = arith.constant 0 : index
    %29 = vector.load %arg4[%c0_17, %c0_18] : memref<8x16xf32, #tpu.memory_space<vmem>>, vector<8x16xf32>
    %30 = arith.subf %11, %29 : vector<8x16xf32>
    %cst_19 = arith.constant 0.000000e+00 : f32
    %31 = vector.shape_cast %10 : vector<8x1xi1> to vector<8x1xi1>
    %32 = vector.broadcast %31 : vector<8x1xi1> to vector<8x16xi1>
    %33 = vector.broadcast %cst_19 : f32 to vector<8x16xf32>
    %34 = arith.select %32, %30, %33 : vector<8x16xi1>, vector<8x16xf32>
    %c0_20 = arith.constant 0 : index
    %c0_21 = arith.constant 0 : index
    %35 = vector.load %arg10[%c0_20, %c0_21] : memref<8x16xf32, #tpu.memory_space<vmem>>, vector<8x16xf32>
    %36 = arith.mulf %34, %34 : vector<8x16xf32>
    %37 = arith.addf %35, %36 : vector<8x16xf32>
    %c0_22 = arith.constant 0 : index
    %c0_23 = arith.constant 0 : index
    %38 = vector.load %arg10[%c0_22, %c0_23] : memref<8x16xf32, #tpu.memory_space<vmem>>, vector<8x16xf32>
    tpu.vector_store %arg10[%c0_22, %c0_23], %37 {strides = array<i32>} : memref<8x16xf32, #tpu.memory_space<vmem>>, vector<8x16xf32>,
    %c0_i32_24 = arith.constant 0 : i32
    %39 = arith.cmpi eq, %arg1, %c0_i32_24 : i32
    %40 = arith.extui %39 : i1 to i32
    %c0_i32_25 = arith.constant 0 : i32
    %41 = arith.cmpi ne, %40, %c0_i32_25 : i32
    scf.if %41 {
      %c0_26 = arith.constant 0 : index
      %c0_27 = arith.constant 0 : index
      %42 = vector.load %arg10[%c0_26, %c0_27] : memref<8x16xf32, #tpu.memory_space<vmem>>, vector<8x16xf32>
      %cst_28 = arith.constant dense<0.000000e+00> : vector<16xf32>
      %43 = vector.multi_reduction <add>, %42, %cst_28 [0] : vector<8x16xf32> to vector<16xf32>
      %44 = vector.shape_cast %43 : vector<16xf32> to vector<1x16xf32>
      %45 = vector.shape_cast %44 : vector<1x16xf32> to vector<1x1x16xf32>
      %c0_29 = arith.constant 0 : index
      %c0_30 = arith.constant 0 : index
      %c0_31 = arith.constant 0 : index
      %46 = vector.load %arg8[%c0_29, %c0_30, %c0_31] : memref<1x1x16xf32, #tpu.memory_space<vmem>>, vector<1x1x16xf32>
      tpu.vector_store %arg8[%c0_29, %c0_30, %c0_31], %45 {strides = array<i32>} : memref<1x1x16xf32, #tpu.memory_space<vmem>>, vector<1x1x16xf32>,
      %c0_32 = arith.constant 0 : index
      %c0_33 = arith.constant 0 : index
      %47 = vector.load %arg11[%c0_32, %c0_33] : memref<8x8xf32, #tpu.memory_space<vmem>>, vector<8x8xf32>
      %cst_34 = arith.constant dense<0.000000e+00> : vector<8xf32>
      %48 = vector.multi_reduction <add>, %47, %cst_34 [0] : vector<8x8xf32> to vector<8xf32>
      %49 = vector.shape_cast %48 : vector<8xf32> to vector<1x8xf32>
      %50 = vector.shape_cast %49 : vector<1x8xf32> to vector<1x1x8xf32>
      %c0_35 = arith.constant 0 : index
      %c0_36 = arith.constant 0 : index
      %c0_37 = arith.constant 0 : index
      %51 = vector.load %arg9[%c0_35, %c0_36, %c0_37] : memref<1x1x8xf32, #tpu.memory_space<vmem>>, vector<1x1x8xf32>
      tpu.vector_store %arg9[%c0_35, %c0_36, %c0_37], %50 {strides = array<i32>} : memref<1x1x8xf32, #tpu.memory_space<vmem>>, vector<1x1x8xf32>,
    } else {
    }
    return
  }
  func.func @transform_0(%arg0: i32, %arg1: i32) -> (i32, i32) {
    %c1_i32 = arith.constant 1 : i32
    %0 = arith.muli %arg0, %c1_i32 : i32
    %1 = arith.addi %0, %arg1 : i32
    %c0_i32 = arith.constant 0 : i32
    %2 = arith.minsi %1, %c0_i32 : i32
    %c0_i32_0 = arith.constant 0 : i32
    %c0_i32_1 = arith.constant 0 : i32
    return %2, %c0_i32_0 : i32, i32
  }
  func.func @transform_1(%arg0: i32, %arg1: i32) -> (i32, i32) {
    %c1_i32 = arith.constant 1 : i32
    %0 = arith.muli %arg0, %c1_i32 : i32
    %1 = arith.addi %0, %arg1 : i32
    %c0_i32 = arith.constant 0 : i32
    %2 = arith.minsi %1, %c0_i32 : i32
    %c0_i32_0 = arith.constant 0 : i32
    %c0_i32_1 = arith.constant 0 : i32
    return %2, %c0_i32_0 : i32, i32
  }
  func.func @transform_2(%arg0: i32, %arg1: i32) -> (i32, i32) {
    %c1_i32 = arith.constant 1 : i32
    %0 = arith.muli %arg0, %c1_i32 : i32
    %1 = arith.addi %0, %arg1 : i32
    %c0_i32 = arith.constant 0 : i32
    %2 = arith.minsi %1, %c0_i32 : i32
    %c0_i32_0 = arith.constant 0 : i32
    %c0_i32_1 = arith.constant 0 : i32
    return %2, %c0_i32_0 : i32, i32
  }
  func.func @transform_3(%arg0: i32, %arg1: i32) -> (i32, i32) {
    %c0_i32 = arith.constant 0 : i32
    %c0_i32_0 = arith.constant 0 : i32
    %c0_i32_1 = arith.constant 0 : i32
    return %c0_i32, %c0_i32_0 : i32, i32
  }
  func.func @transform_4(%arg0: i32, %arg1: i32) -> (i32, i32) {
    %c0_i32 = arith.constant 0 : i32
    %c0_i32_0 = arith.constant 0 : i32
    %c0_i32_1 = arith.constant 0 : i32
    return %c0_i32, %c0_i32_0 : i32, i32
  }
  func.func @transform_5(%arg0: i32, %arg1: i32) -> (i32, i32) {
    %c0_i32 = arith.constant 0 : i32
    %c0_i32_0 = arith.constant 0 : i32
    %c0_i32_1 = arith.constant 0 : i32
    return %c0_i32, %c0_i32_0 : i32, i32
  }
  func.func @transform_6(%arg0: i32, %arg1: i32) -> (i32, i32, i32) {
    %c0_i32 = arith.constant 0 : i32
    %c0_i32_0 = arith.constant 0 : i32
    %c0_i32_1 = arith.constant 0 : i32
    return %arg0, %c0_i32, %c0_i32_0 : i32, i32, i32
  }
  func.func @transform_7(%arg0: i32, %arg1: i32) -> (i32, i32, i32) {
    %c0_i32 = arith.constant 0 : i32
    %c0_i32_0 = arith.constant 0 : i32
    %c0_i32_1 = arith.constant 0 : i32
    return %arg0, %c0_i32, %c0_i32_0 : i32, i32, i32
  }
}

</mosaic_0001>

<llo_original>
// kernel: tpu_custom_call.1
$region0: #{tpu_custom_call.1}
  #allocation0 [shape = 'u32[]', space=smem, size = 0x4, offset = 0x4, fixed_abs, tag = 'smem constant byte address 0x4 - core index']
  #allocation1 [shape = 'u32[144,128]{1,0:T(1,128)}', space=vmem, size = 0x12000, scoped, tag = 'internal scratch']
  #allocation2 [shape = 'f32[8,16]{1,0:T(8,128)}', space=vmem, size = 0x1000, scoped, tag = 'scratch operand']
  #allocation3 [shape = 'f32[8,8]{1,0:T(8,128)}', space=vmem, size = 0x1000, scoped, tag = 'scratch operand']
  %s0 = inlined_call_operand.vmem [shape: f32[8,16], index: 0, kind: input, shape index: {}]
  %s1 = inlined_call_operand.vmem [shape: f32[8,16], index: 1, kind: input, shape index: {}]
  %s2 = inlined_call_operand.vmem [shape: f32[8,16], index: 2, kind: input, shape index: {}]
  %s3 = inlined_call_operand.vmem [shape: f32[16,8], index: 3, kind: input, shape index: {}]
  %s4 = inlined_call_operand.vmem [shape: f32[16,8], index: 4, kind: input, shape index: {}]
  %s5 = inlined_call_operand.vmem [shape: f32[1,8], index: 5, kind: input, shape index: {}]
  %s6 = inlined_call_operand.hbm [shape: f32[1,1,16], index: 6, kind: output, shape index: {0}]
  %s7 = inlined_call_operand.hbm [shape: f32[1,1,8], index: 7, kind: output, shape index: {1}]
  %8 = xla_tuple %s6, %s7
  %s9 = sld [smem:[#allocation0]]
  $region50: #{tpu_custom_call.1} parent=0
    _
  %s11 = ssub.s32 1, %s9
  %s12 = scalar_select 0, %s11, %s9
  $region1: #{tpu_custom_call.1} parent=0
    #allocation4 [shape = 'u8[512]{0}', space=vmem, size = 0x400, scoped, tag = 'output window, operand 0, single buffered']
    #allocation5 [shape = 's32[1]{0}', space=sflag, size = 0x4, scoped, tag = 'scoped memory for tpu_custom_call.1']
    #allocation6 [shape = 'u8[512]{0}', space=vmem, size = 0x400, scoped, tag = 'output window, operand 1, single buffered']
    #allocation7 [shape = 's32[1]{0}', space=sflag, size = 0x4, scoped, tag = 'scoped memory for tpu_custom_call.1']
    %13 = vsyncpa [#allocation5], 0
    %14 = vsyncpa [#allocation7], 0
    // Predicated region
    $region2: #{tpu_custom_call.1} parent=1 // pred_check
      _
    $region3: #{tpu_custom_call.1} parent=1 // pred_check_branch
      %16 = sbr.rel (0) target = $region5
    $region4: #{tpu_custom_call.1} parent=1 // pred_region
      %s17 = sadd.s32 0, 0
      %p18 = scmp.lt.s32.totalorder %s17, 0
      %s19 = scalar_select %p18, %s17, 0
      %p20 = scmp.lt.s32.totalorder %s19, 0
      %s21 = scalar_select %p20, %s19, 0
      %s22 = smul.addr %s21, 8
      %s23 = scalar_lea.vmem %s0, %s22
      %s24 = sadd.s32 0, 0
      %p25 = scmp.lt.s32.totalorder %s24, 0
      %s26 = scalar_select %p25, %s24, 0
    $region5: #{tpu_custom_call.1} parent=1 // pred_fallthru
      _
    // Predicated region
    $region6: #{tpu_custom_call.1} parent=1 // pred_check
      _
    $region7: #{tpu_custom_call.1} parent=1 // pred_check_branch
      %28 = sbr.rel (0) target = $region9
    $region8: #{tpu_custom_call.1} parent=1 // pred_region
      %s29 = sadd.s32 0, 0
      %p30 = scmp.lt.s32.totalorder %s29, 0
      %s31 = scalar_select %p30, %s29, 0
      %p32 = scmp.lt.s32.totalorder %s31, 0
      %s33 = scalar_select %p32, %s31, 0
      %s34 = smul.addr %s33, 8
      %s35 = scalar_lea.vmem %s1, %s34
      %s36 = sadd.s32 0, 0
      %p37 = scmp.lt.s32.totalorder %s36, 0
      %s38 = scalar_select %p37, %s36, 0
    $region9: #{tpu_custom_call.1} parent=1 // pred_fallthru
      _
    // Predicated region
    $region10: #{tpu_custom_call.1} parent=1 // pred_check
      _
    $region11: #{tpu_custom_call.1} parent=1 // pred_check_branch
      %40 = sbr.rel (0) target = $region13
    $region12: #{tpu_custom_call.1} parent=1 // pred_region
      %s41 = sadd.s32 0, 0
      %p42 = scmp.lt.s32.totalorder %s41, 0
      %s43 = scalar_select %p42, %s41, 0
      %p44 = scmp.lt.s32.totalorder %s43, 0
      %s45 = scalar_select %p44, %s43, 0
      %s46 = smul.addr %s45, 8
      %s47 = scalar_lea.vmem %s2, %s46
      %s48 = sadd.s32 0, 0
      %p49 = scmp.lt.s32.totalorder %s48, 0
      %s50 = scalar_select %p49, %s48, 0
    $region13: #{tpu_custom_call.1} parent=1 // pred_fallthru
      _
    // Predicated region
    $region14: #{tpu_custom_call.1} parent=1 // pred_check
      _
    $region15: #{tpu_custom_call.1} parent=1 // pred_check_branch
      %52 = sbr.rel (0) target = $region17
    $region16: #{tpu_custom_call.1} parent=1 // pred_region
      _
    $region17: #{tpu_custom_call.1} parent=1 // pred_fallthru
      _
    // Predicated region
    $region18: #{tpu_custom_call.1} parent=1 // pred_check
      _
    $region19: #{tpu_custom_call.1} parent=1 // pred_check_branch
      %54 = sbr.rel (0) target = $region21
    $region20: #{tpu_custom_call.1} parent=1 // pred_region
      _
    $region21: #{tpu_custom_call.1} parent=1 // pred_fallthru
      _
    // Predicated region
    $region22: #{tpu_custom_call.1} parent=1 // pred_check
      _
    $region23: #{tpu_custom_call.1} parent=1 // pred_check_branch
      %56 = sbr.rel (0) target = $region25
    $region24: #{tpu_custom_call.1} parent=1 // pred_region
      _
    $region25: #{tpu_custom_call.1} parent=1 // pred_fallthru
      _
    %s57 = sadd.s32 0, 0
    %p58 = scmp.lt.s32.totalorder %s57, 0
    %s59 = scalar_select %p58, %s57, 0
    %p60 = scmp.lt.s32.totalorder %s59, 0
    %s61 = scalar_select %p60, %s59, 0
    %s62 = smul.addr %s61, 8
    %s63 = scalar_lea.vmem %s0, %s62
    %s64 = sadd.s32 0, 0
    %p65 = scmp.lt.s32.totalorder %s64, 0
    %s66 = scalar_select %p65, %s64, 0
    %p67 = scmp.lt.s32.totalorder %s66, 0
    %s68 = scalar_select %p67, %s66, 0
    %s69 = smul.addr %s68, 8
    %s70 = scalar_lea.vmem %s1, %s69
    %s71 = sadd.s32 0, 0
    %p72 = scmp.lt.s32.totalorder %s71, 0
    %s73 = scalar_select %p72, %s71, 0
    %p74 = scmp.lt.s32.totalorder %s73, 0
    %s75 = scalar_select %p74, %s73, 0
    %s76 = smul.addr %s75, 8
    %s77 = scalar_lea.vmem %s2, %s76
    %s78 = sadd.s32 0, 0
    %p79 = scmp.lt.s32.totalorder %s78, 0
    %s80 = scalar_select %p79, %s78, 0
    %p81 = scmp.lt.s32.totalorder %s80, 0
    %s82 = scalar_select %p81, %s80, 0
    %s83 = smul.addr %s82, 8
    %s84 = scalar_lea.vmem %s0, %s83
    %s85 = sadd.s32 0, 0
    %p86 = scmp.lt.s32.totalorder %s85, 0
    %s87 = scalar_select %p86, %s85, 0
    %s88 = sadd.s32 0, 0
    %p89 = scmp.lt.s32.totalorder %s88, 0
    %s90 = scalar_select %p89, %s88, 0
    %p91 = scmp.lt.s32.totalorder %s90, 0
    %s92 = scalar_select %p91, %s90, 0
    %s93 = smul.addr %s92, 8
    %s94 = scalar_lea.vmem %s1, %s93
    %s95 = sadd.s32 0, 0
    %p96 = scmp.lt.s32.totalorder %s95, 0
    %s97 = scalar_select %p96, %s95, 0
    %s98 = sadd.s32 0, 0
    %p99 = scmp.lt.s32.totalorder %s98, 0
    %s100 = scalar_select %p99, %s98, 0
    %p101 = scmp.lt.s32.totalorder %s100, 0
    %s102 = scalar_select %p101, %s100, 0
    %s103 = smul.addr %s102, 8
    %s104 = scalar_lea.vmem %s2, %s103
    %s105 = sadd.s32 0, 0
    %p106 = scmp.lt.s32.totalorder %s105, 0
    %s107 = scalar_select %p106, %s105, 0
    %p108 = scmp.eq.s32.totalorder 0, 0
    // Predicated region
    $region26: #{tpu_custom_call.1} parent=1 // pred_check
      %p109 = pneg %p108
    $region27: #{tpu_custom_call.1} parent=1 // pred_check_branch
      %111 = sbr.rel (%p109) target = $region29
    $region28: #{tpu_custom_call.1} parent=1 // pred_region
      %vm112 = vcmask 130048
      %113 = vst.msk [vmem:[#allocation2] sm:$0xff] %vm112, 0.0
      %vm114 = vcmask 64512
      %115 = vst.msk [vmem:[#allocation3] sm:$0xff] %vm114, 0.0
    $region29: #{tpu_custom_call.1} parent=1 // pred_fallthru
      _
    %s116 = sadd.s32 0, 0
    %s117 = smul.u32 %s116, 8
    %v118 = vlaneseq
    %v119 = vshrl.u32 %v118, 7
    %v120 = vstv %s117
    %v121 = vadd.s32 %v120, %v119
    %vm122 = vcmp.lt.s32.totalorder %v121, 8
    %v123 = vld [vmem:[%s84] sm:$0xff]
    %v124 = vld [vmem:[%s3] sm:$0xff]
    %v125 = vld [vmem:[%s3 + $0x8] sm:$0xff]
    %v126 = vld [vmem:[%s94] sm:$0xff]
    %v127 = vld [vmem:[%s4] sm:$0xff]
    %v128 = vld [vmem:[%s4 + $0x8] sm:$0xff]
    %vm129 = vcmask 130048
    %v131 = vsel %vm129, %v126, 0
    %133 = vmatprep.subr.mxu0 0.0
    %134 = vmatpush1.msra.mxu0 %v127
    %135 = vmatprep.subr.mxu0 0.0
    %136 = vmatpush1.msra.mxu0 %v128
    %137 = vmatprep.subr.mxu0 0.0
    %138 = vmatpush1.msra.mxu0 0.0
    %139 = vmatprep.subr.mxu0 0.0
    %140 = vmatpush1.msra.mxu0 0.0
    %141 = vmatprep.subr.mxu0 0.0
    %142 = vmatpush1.msra.mxu0 0.0
    %143 = vmatprep.subr.mxu0 0.0
    %144 = vmatpush1.msra.mxu0 0.0
    %145 = vmatprep.subr.mxu0 0.0
    %146 = vmatpush1.msra.mxu0 0.0
    %147 = vmatprep.subr.mxu0 0.0
    %148 = vmatpush1.msra.mxu0 0.0
    %149 = vmatprep.subr.mxu0 0.0
    %150 = vmatpush1.msra.mxu0 0.0
    %151 = vmatprep.subr.mxu0 0.0
    %152 = vmatpush1.msra.mxu0 0.0
    %153 = vmatprep.subr.mxu0 0.0
    %154 = vmatpush1.msra.mxu0 0.0
    %155 = vmatprep.subr.mxu0 0.0
    %156 = vmatpush1.msra.mxu0 0.0
    %157 = vmatprep.subr.mxu0 0.0
    %158 = vmatpush1.msra.mxu0 0.0
    %159 = vmatprep.subr.mxu0 0.0
    %160 = vmatpush1.msra.mxu0 0.0
    %161 = vmatprep.subr.mxu0 0.0
    %162 = vmatpush1.msra.mxu0 0.0
    %163 = vmatprep.subr.mxu0 0.0
    %164 = vmatpush1.msra.mxu0 0.0
    %165 = vmatprep.subr.mxu0 0.0
    %166 = vmatpush1.msra.mxu0 0.0
    %167 = vmatprep.subr.mxu0 0.0
    %168 = vmatpush1.msra.mxu0 0.0
    %169 = vmatprep.subr.mxu0 0.0
    %170 = vmatpush1.msra.mxu0 0.0
    %171 = vmatprep.subr.mxu0 0.0
    %172 = vmatpush1.msra.mxu0 0.0
    %173 = vmatprep.subr.mxu0 0.0
    %174 = vmatpush1.msra.mxu0 0.0
    %175 = vmatprep.subr.mxu0 0.0
    %176 = vmatpush1.msra.mxu0 0.0
    %177 = vmatprep.subr.mxu0 0.0
    %178 = vmatpush1.msra.mxu0 0.0
    %179 = vmatprep.subr.mxu0 0.0
    %180 = vmatpush1.msra.mxu0 0.0
    %181 = vmatprep.subr.mxu0 0.0
    %182 = vmatpush1.msra.mxu0 0.0
    %183 = vmatprep.subr.mxu0 0.0
    %184 = vmatpush1.msra.mxu0 0.0
    %185 = vmatprep.subr.mxu0 0.0
    %186 = vmatpush1.msra.mxu0 0.0
    %187 = vmatprep.subr.mxu0 0.0
    %188 = vmatpush1.msra.mxu0 0.0
    %189 = vmatprep.subr.mxu0 0.0
    %190 = vmatpush1.msra.mxu0 0.0
    %191 = vmatprep.subr.mxu0 0.0
    %192 = vmatpush1.msra.mxu0 0.0
    %193 = vmatprep.subr.mxu0 0.0
    %194 = vmatpush1.msra.mxu0 0.0
    %195 = vmatprep.subr.mxu0 0.0
    %196 = vmatpush1.msra.mxu0 0.0
    %197 = vmatprep.mubr.f32.mxu0 0.0
    %198 = vmatmul.mubr.f32.gmra.mrb[0].mxu0 %v131
    %v199 = vpop.f32.mrb[0].mxu0
    %v200 = vadd.f32 0.0, %v199
    %v201 = vpop.f32.mrb[0].mxu0
    %202 = vdwg.mxu0
    %v204 = vsel %vm129, %v123, 0
    %206 = vmatprep.subr.mxu0 0.0
    %207 = vmatpush1.msra.mxu0 %v124
    %208 = vmatprep.subr.mxu0 0.0
    %209 = vmatpush1.msra.mxu0 %v125
    %210 = vmatprep.subr.mxu0 0.0
    %211 = vmatpush1.msra.mxu0 0.0
    %212 = vmatprep.subr.mxu0 0.0
    %213 = vmatpush1.msra.mxu0 0.0
    %214 = vmatprep.subr.mxu0 0.0
    %215 = vmatpush1.msra.mxu0 0.0
    %216 = vmatprep.subr.mxu0 0.0
    %217 = vmatpush1.msra.mxu0 0.0
    %218 = vmatprep.subr.mxu0 0.0
    %219 = vmatpush1.msra.mxu0 0.0
    %220 = vmatprep.subr.mxu0 0.0
    %221 = vmatpush1.msra.mxu0 0.0
    %222 = vmatprep.subr.mxu0 0.0
    %223 = vmatpush1.msra.mxu0 0.0
    %224 = vmatprep.subr.mxu0 0.0
    %225 = vmatpush1.msra.mxu0 0.0
    %226 = vmatprep.subr.mxu0 0.0
    %227 = vmatpush1.msra.mxu0 0.0
    %228 = vmatprep.subr.mxu0 0.0
    %229 = vmatpush1.msra.mxu0 0.0
    %230 = vmatprep.subr.mxu0 0.0
    %231 = vmatpush1.msra.mxu0 0.0
    %232 = vmatprep.subr.mxu0 0.0
    %233 = vmatpush1.msra.mxu0 0.0
    %234 = vmatprep.subr.mxu0 0.0
    %235 = vmatpush1.msra.mxu0 0.0
    %236 = vmatprep.subr.mxu0 0.0
    %237 = vmatpush1.msra.mxu0 0.0
    %238 = vmatprep.subr.mxu0 0.0
    %239 = vmatpush1.msra.mxu0 0.0
    %240 = vmatprep.subr.mxu0 0.0
    %241 = vmatpush1.msra.mxu0 0.0
    %242 = vmatprep.subr.mxu0 0.0
    %243 = vmatpush1.msra.mxu0 0.0
    %244 = vmatprep.subr.mxu0 0.0
    %245 = vmatpush1.msra.mxu0 0.0
    %246 = vmatprep.subr.mxu0 0.0
    %247 = vmatpush1.msra.mxu0 0.0
    %248 = vmatprep.subr.mxu0 0.0
    %249 = vmatpush1.msra.mxu0 0.0
    %250 = vmatprep.subr.mxu0 0.0
    %251 = vmatpush1.msra.mxu0 0.0
    %252 = vmatprep.subr.mxu0 0.0
    %253 = vmatpush1.msra.mxu0 0.0
    %254 = vmatprep.subr.mxu0 0.0
    %255 = vmatpush1.msra.mxu0 0.0
    %256 = vmatprep.subr.mxu0 0.0
    %257 = vmatpush1.msra.mxu0 0.0
    %258 = vmatprep.subr.mxu0 0.0
    %259 = vmatpush1.msra.mxu0 0.0
    %260 = vmatprep.subr.mxu0 0.0
    %261 = vmatpush1.msra.mxu0 0.0
    %262 = vmatprep.subr.mxu0 0.0
    %263 = vmatpush1.msra.mxu0 0.0
    %264 = vmatprep.subr.mxu0 0.0
    %265 = vmatpush1.msra.mxu0 0.0
    %266 = vmatprep.subr.mxu0 0.0
    %267 = vmatpush1.msra.mxu0 0.0
    %268 = vmatprep.subr.mxu0 0.0
    %269 = vmatpush1.msra.mxu0 0.0
    %270 = vmatprep.mubr.f32.mxu0 0.0
    %271 = vmatmul.mubr.f32.gmra.mrb[0].mxu0 %v204
    %v272 = vpop.f32.mrb[0].mxu0
    %v273 = vadd.f32 %v200, %v272
    %v274 = vpop.f32.mrb[0].mxu0
    %275 = vdwg.mxu0
    %v276 = vld [vmem:[%s5] sm:$0x1]
    %v278 = vlaneseq
    %v279 = vshrl.u32 %v278, 7
    %v280 = vsub.s32 0, %v279
    %v281 = vrot.slane %v276, %v280
    %v283 = vsub.f32 %v273, %v281
    %v284 = vsel %vm122, 1, 0
    %vm285 = vcmp.eq.s32.totalorder %v284, 1
    %v286 = vsel %vm285, %v283, 0.0
    %v287 = vld [vmem:[#allocation3] sm:$0xff]
    %v288 = vmul.f32 %v286, %v286
    %v289 = vadd.f32 %v287, %v288
    %vm290 = vcmask 64512
    %291 = vst.msk [vmem:[#allocation3] sm:$0xff] %vm290, %v289
    %v292 = vld [vmem:[%s104] sm:$0xff]
    %v293 = vsub.f32 %v123, %v292
    %v294 = vsel %vm285, %v293, 0.0
    %v295 = vld [vmem:[#allocation2] sm:$0xff]
    %v296 = vmul.f32 %v294, %v294
    %v297 = vadd.f32 %v295, %v296
    %298 = vst.msk [vmem:[#allocation2] sm:$0xff] %vm129, %v297
    // Predicated region
    $region30: #{tpu_custom_call.1} parent=1 // pred_check
      %p299 = pneg %p108
    $region31: #{tpu_custom_call.1} parent=1 // pred_check_branch
      %301 = sbr.rel (%p299) target = $region33
    $region32: #{tpu_custom_call.1} parent=1 // pred_region
      %v302 = vld [vmem:[#allocation2] sm:$0xff]
      %v303 = vsel %vm129, %v302, 0.0
      %v304 = vrot.slane %v303, 4
      %v305 = vadd.f32 %v303, %v304
      %v306 = vrot.slane %v305, 2
      %v307 = vadd.f32 %v305, %v306
      %v308 = vrot.slane %v307, 1
      %v309 = vadd.f32 %v307, %v308
      %vm310 = vcmask 122880
      %311 = vst.msk [vmem:[#allocation4] sm:$0x1] %vm310, %v309
      %v312 = vld [vmem:[#allocation3] sm:$0xff]
      %v313 = vsel %vm290, %v312, 0.0
      %v314 = vrot.slane %v313, 4
      %v315 = vadd.f32 %v313, %v314
      %v316 = vrot.slane %v315, 2
      %v317 = vadd.f32 %v315, %v316
      %v318 = vrot.slane %v317, 1
      %v319 = vadd.f32 %v317, %v318
      %vm320 = vcmask 57344
      %321 = vst.msk [vmem:[#allocation6] sm:$0x1] %vm320, %v319
    $region33: #{tpu_custom_call.1} parent=1 // pred_fallthru
      _
    // Predicated region
    $region34: #{tpu_custom_call.1} parent=1 // pred_check
      _
    $region35: #{tpu_custom_call.1} parent=1 // pred_check_branch
      %323 = sbr.rel (0) target = $region37
    $region36: #{tpu_custom_call.1} parent=1 // pred_region
      %s325 = ssub.s32 16, 16
      %326 = vsyncadd [#allocation5], %s325
      %s328 = sshll.u32 [#allocation4], 4
      %s329 = int_to_ptr.vmem [resolvable:$true] %s328
      %331 = dma.vmem_to_hbm [thread:$0]  %s329, 16, %s6, [#allocation5]
    $region37: #{tpu_custom_call.1} parent=1 // pred_fallthru
      _
    // Predicated region
    $region38: #{tpu_custom_call.1} parent=1 // pred_check
      _
    $region39: #{tpu_custom_call.1} parent=1 // pred_check_branch
      %333 = sbr.rel (0) target = $region41
    $region40: #{tpu_custom_call.1} parent=1 // pred_region
      %s335 = ssub.s32 16, 16
      %336 = vsyncadd [#allocation7], %s335
      %s338 = sshll.u32 [#allocation6], 4
      %s339 = int_to_ptr.vmem [resolvable:$true] %s338
      %341 = dma.vmem_to_hbm [thread:$0]  %s339, 16, %s7, [#allocation7]
    $region41: #{tpu_custom_call.1} parent=1 // pred_fallthru
      _
    // Predicated region
    $region42: #{tpu_custom_call.1} parent=1 // pred_check
      _
    $region43: #{tpu_custom_call.1} parent=1 // pred_check_branch
      %343 = sbr.rel (0) target = $region45
    $region44: #{tpu_custom_call.1} parent=1 // pred_region
      %344 = dma.done [#allocation5], 16
    $region45: #{tpu_custom_call.1} parent=1 // pred_fallthru
      _
    // Predicated region
    $region46: #{tpu_custom_call.1} parent=1 // pred_check
      _
    $region47: #{tpu_custom_call.1} parent=1 // pred_check_branch
      %346 = sbr.rel (0) target = $region49
    $region48: #{tpu_custom_call.1} parent=1 // pred_region
      %347 = dma.done [#allocation7], 16
    $region49: #{tpu_custom_call.1} parent=1 // pred_fallthru
      _
    %348 = vsyncpa [#allocation5], 1
    %349 = vsyncpa [#allocation7], 1

</llo_original>
